<compile_context>
chip_gen: v6e
topology: v6e:2x2x1
jax: 0.10.0
libtpu: 0.0.40
codegen_flags: <defaults>
</compile_context>

<pallas_src>
import math
from functools import partial

import jax
import jax.numpy as jnp
from jax.experimental import pallas as pl
from jax.experimental.pallas import tpu as pltpu


# --- sinusoidal table (identical to the PyTorch __init__) --------------------

def _build_pe(d_model: int, max_len: int) -> jnp.ndarray:
    position = jnp.arange(0, max_len, dtype=jnp.float32)[:, None]          # (L, 1)
    div_term = jnp.exp(jnp.arange(0, d_model, 2, dtype=jnp.float32)
                       * (-math.log(10000.0) / d_model))                   # (D/2,)
    pe = jnp.zeros((max_len, d_model), dtype=jnp.float32)
    pe = pe.at[:, 0::2].set(jnp.sin(position * div_term))
    pe = pe.at[:, 1::2].set(jnp.cos(position * div_term))
    return pe                                                              # (L, D)


# --- dropout helper -----------------------------------------------------------

def _dropout_from_bits(y, bits_u32, p: float):
    threshold = jnp.uint32(min(int(p * (2 ** 32)), 2 ** 32 - 1))
    keep = bits_u32 >= threshold                    # P(keep) = 1 - p
    scale = jnp.asarray(1.0 / (1.0 - p), dtype=y.dtype)
    return jnp.where(keep, y * scale, jnp.zeros_like(y))


# --- kernels ------------------------------------------------------------------
# In both layouts pe_ref's block broadcasts (or matches) x_ref's block directly:
#   3-D path : x (tS, B, D) + pe (tS, 1, D)   -> native sublane broadcast
#   flat path: x (tS, B*D)  + pe (tS, B*D)    -> lane-dense, no broadcast needed

def _pe_add_kernel(x_ref, pe_ref, o_ref):
    o_ref[...] = x_ref[...] + pe_ref[...]


def _pe_add_dropout_hw_kernel(seed_ref, x_ref, pe_ref, o_ref, *, p: float):
    # training mode on TPU: on-chip PRNG, seeded per tile -> independent masks.
    y = x_ref[...] + pe_ref[...]
    pltpu.prng_seed(seed_ref[0], pl.program_id(0))
    bits = pltpu.prng_random_bits(y.shape)
    if bits.dtype != jnp.uint32:                    # trace-time check only
        bits = pltpu.bitcast(bits, jnp.uint32)
    o_ref[...] = _dropout_from_bits(y, bits, p)


def _pe_add_dropout_bits_kernel(x_ref, pe_ref, bits_ref, o_ref, *, p: float):
    # training-mode fallback (non-TPU backends): bits precomputed outside.
    y = x_ref[...] + pe_ref[...]
    o_ref[...] = _dropout_from_bits(y, bits_ref[...], p)


# --- tiling / VMEM policy -----------------------------------------------------

def _round_up(n: int, m: int) -> int:
    return ((n + m - 1) // m) * m


def _vmem_budgets():
    """(tile budget bytes, vmem_limit_bytes), per TPU generation."""
    budget, limit = 16 << 20, 32 << 20              # conservative default
    try:
        cap = int(pltpu.get_tpu_info().vmem_capacity_bytes)
    except Exception:
        return budget, limit
    if cap >= (100 << 20):                          # v5e / v6e: 128 MiB physical
        budget, limit = 48 << 20, 96 << 20
    else:                                           # v7x: 64 MiB per TensorCore
        budget, limit = 20 << 20, 40 << 20
    limit = min(limit, (cap * 3) // 4)              # never ask beyond physical
    budget = min(budget, limit // 2)
    return budget, limit


def _choose_tiling(S: int, per_row_bytes: int, budget_bytes: int):
    """Pick tile length tS (multiple of 8 when possible) and number of tiles."""
    tS = budget_bytes // max(per_row_bytes, 1)
    if tS >= S:
        # Everything fits in one tile: still split when S > 8 so the
        # "parallel" grid axis feeds both v7x TensorCores.
        tS = max(8, _round_up(pl.cdiv(S, 2), 8)) if S > 8 else S
    else:
        tS = max(8, (tS // 8) * 8)
    n = pl.cdiv(S, tS)
    if n > 1 and n % 2 == 1:
        # Prefer an even tile count (balanced across two TensorCores).
        tS2 = max(8, _round_up(pl.cdiv(S, n + 1), 8))
        if pl.cdiv(S, tS2) % 2 == 0:
            tS = tS2
    return tS, pl.cdiv(S, max(tS, 1))


# --- wrapper ------------------------------------------------------------------

def positional_encoding(x: jnp.ndarray,
                        pe_table: jnp.ndarray,
                        *,
                        dropout_p: float = 0.1,
                        training: bool = False,
                        seed: int = 0,
                        rng_key=None) -> jnp.ndarray:
    """x: [S, B, D]; pe_table: [max_len, D] float32."""
    S, B, D = x.shape
    dt = x.dtype
    itemsize = jnp.dtype(dt).itemsize
    pe = pe_table[:S].astype(dt)                            # (S, D)

    do_dropout = training and dropout_p > 0.0
    use_bits_fallback = do_dropout and jax.default_backend() != "tpu"

    # Lane-dense path: fold batch into the lane axis when d_model alone is not
    # a multiple of 128 but B*D is (avoids masked vst.msk partial stores).
    use_flat = (D % 128 != 0) and ((B * D) % 128 == 0)

    budget, vmem_limit = _vmem_budgets()

    pe_row_elems = B * D if use_flat else D
    per_row = 2 * 2 * B * D * itemsize                      # x + out, double-buffered
    per_row += 2 * pe_row_elems * itemsize                  # pe, double-buffered
    if use_bits_fallback:
        per_row += 2 * B * D * 4                            # streamed uint32 bits
    if do_dropout and not use_bits_fallback:
        per_row += 2 * B * D * 4 + B * D * itemsize         # in-kernel bits + y temps
    tS, n_tiles = _choose_tiling(S, per_row, budget)
    grid = (n_tiles,)

    if use_flat:
        x_in = x.reshape(S, B * D)
        pe_in = jnp.tile(pe, (1, B))                        # (S, B*D), built once
        x_spec = pl.BlockSpec((tS, B * D), lambda i: (i, 0))
        pe_spec = pl.BlockSpec((tS, B * D), lambda i: (i, 0))
        out_spec = pl.BlockSpec((tS, B * D), lambda i: (i, 0))
        out_shape = jax.ShapeDtypeStruct((S, B * D), dt)
    else:
        x_in = x
        pe_in = pe.reshape(S, 1, D)                         # sublane-broadcast operand
        x_spec = pl.BlockSpec((tS, B, D), lambda i: (i, 0, 0))
        pe_spec = pl.BlockSpec((tS, 1, D), lambda i: (i, 0, 0))
        out_spec = pl.BlockSpec((tS, B, D), lambda i: (i, 0, 0))
        out_shape = jax.ShapeDtypeStruct((S, B, D), dt)

    cparams = pltpu.CompilerParams(
        dimension_semantics=("parallel",),
        vmem_limit_bytes=vmem_limit,
    )

    if not do_dropout:
        out = pl.pallas_call(
            _pe_add_kernel,
            out_shape=out_shape,
            grid=grid,
            in_specs=[x_spec, pe_spec],
            out_specs=out_spec,
            compiler_params=cparams,
        )(x_in, pe_in)
    elif not use_bits_fallback:
        # On-chip PRNG path (TPU).
        seed_arr = jnp.array([seed], dtype=jnp.int32)
        out = pl.pallas_call(
            partial(_pe_add_dropout_hw_kernel, p=float(dropout_p)),
            out_shape=out_shape,
            grid=grid,
            in_specs=[pl.BlockSpec(memory_space=pltpu.SMEM),  # seed scalar
                      x_spec, pe_spec],
            out_specs=out_spec,
            compiler_params=cparams,
        )(seed_arr, x_in, pe_in)
    else:
        # Portable fallback: random bits from jax.random streamed through the grid.
        key = rng_key if rng_key is not None else jax.random.PRNGKey(seed)
        bits = jax.random.bits(key, x_in.shape, dtype=jnp.uint32)
        out = pl.pallas_call(
            partial(_pe_add_dropout_bits_kernel, p=float(dropout_p)),
            out_shape=out_shape,
            grid=grid,
            in_specs=[x_spec, pe_spec, x_spec],
            out_specs=out_spec,
            compiler_params=cparams,
        )(x_in, pe_in, bits)

    if use_flat:
        out = out.reshape(S, B, D)
    return out


if __name__ == "__main__":
    max_len = 5000
    p = 0.1
    scale = 1.0 / (1.0 - p)

    key = jax.random.PRNGKey(0)
    k1, k2 = jax.random.split(key)

    # --- shape 1: seq=8, batch=2, d_model=32 (3-D sublane-broadcast path) ----
    S, B, D = 8, 2, 32
    x = jax.random.normal(k1, (S, B, D), dtype=jnp.float32)
    pe_table = _build_pe(D, max_len)
    ref = x + pe_table[:S][:, None, :]

    out = jax.block_until_ready(
        positional_encoding(x, pe_table, dropout_p=p, training=False))
    assert out.shape == (S, B, D)
    assert jnp.allclose(out, ref, atol=1e-6, rtol=1e-6), "eval mismatch (3-D path)"

    out_tr = jax.block_until_ready(
        positional_encoding(x, pe_table, dropout_p=p, training=True, seed=42))
    assert out_tr.shape == (S, B, D)
    recon = jnp.where(out_tr == 0.0, 0.0, ref * scale)
    assert jnp.allclose(out_tr, recon, atol=1e-5, rtol=1e-5), "dropout mismatch (3-D path)"

    # --- shape 2: seq=16, batch=4, d_model=32 (lane-dense flat path, 2 tiles) -
    S2, B2, D2 = 16, 4, 32
    x2 = jax.random.normal(k2, (S2, B2, D2), dtype=jnp.float32)
    pe_table2 = _build_pe(D2, max_len)
    ref2 = x2 + pe_table2[:S2][:, None, :]

    out2 = jax.block_until_ready(
        positional_encoding(x2, pe_table2, dropout_p=p, training=False))
    assert out2.shape == (S2, B2, D2)
    assert jnp.allclose(out2, ref2, atol=1e-6, rtol=1e-6), "eval mismatch (flat path)"

    out2_tr = jax.block_until_ready(
        positional_encoding(x2, pe_table2, dropout_p=p, training=True, seed=7))
    recon2 = jnp.where(out2_tr == 0.0, 0.0, ref2 * scale)
    assert jnp.allclose(out2_tr, recon2, atol=1e-5, rtol=1e-5), "dropout mismatch (flat path)"

    print("KERNEL_OK")
</pallas_src>

<mosaic_0001>
module attributes {stable_mosaic.version = 11 : i64} {
  func.func @_pe_add_kernel(%arg0: i32, %arg1: memref<8x2x32xf32, #tpu.memory_space<vmem>>, %arg2: memref<8x1x32xf32, #tpu.memory_space<vmem>>, %arg3: memref<8x2x32xf32, #tpu.memory_space<vmem>>) attributes {dimension_semantics = [#tpu.dimension_semantics<parallel>], iteration_bounds = array<i64: 1>, scalar_prefetch = 0 : i64, scratch_operands = 0 : i64, tpu.core_type = #tpu.core_type<tc>, window_params = [{transform_indices = @transform_0, window_bounds = array<i64: 8, 2, 32>}, {transform_indices = @transform_1, window_bounds = array<i64: 8, 1, 32>}, {transform_indices = @transform_2, window_bounds = array<i64: 8, 2, 32>}]} {
    %c0 = arith.constant 0 : index
    %c0_0 = arith.constant 0 : index
    %c0_1 = arith.constant 0 : index
    %0 = vector.load %arg1[%c0, %c0_0, %c0_1] : memref<8x2x32xf32, #tpu.memory_space<vmem>>, vector<8x2x32xf32>
    %c0_2 = arith.constant 0 : index
    %c0_3 = arith.constant 0 : index
    %c0_4 = arith.constant 0 : index
    %1 = vector.load %arg2[%c0_2, %c0_3, %c0_4] : memref<8x1x32xf32, #tpu.memory_space<vmem>>, vector<8x1x32xf32>
    %2 = vector.broadcast %1 : vector<8x1x32xf32> to vector<8x2x32xf32>
    %3 = arith.addf %0, %2 : vector<8x2x32xf32>
    %c0_5 = arith.constant 0 : index
    %c0_6 = arith.constant 0 : index
    %c0_7 = arith.constant 0 : index
    %4 = vector.load %arg3[%c0_5, %c0_6, %c0_7] : memref<8x2x32xf32, #tpu.memory_space<vmem>>, vector<8x2x32xf32>
    tpu.vector_store %arg3[%c0_5, %c0_6, %c0_7], %3 {strides = array<i32>} : memref<8x2x32xf32, #tpu.memory_space<vmem>>, vector<8x2x32xf32>,
    return
  }
  func.func @transform_0(%arg0: i32) -> (i32, i32, i32) {
    %c0_i32 = arith.constant 0 : i32
    %c0_i32_0 = arith.constant 0 : i32
    %c0_i32_1 = arith.constant 0 : i32
    return %arg0, %c0_i32, %c0_i32_0 : i32, i32, i32
  }
  func.func @transform_1(%arg0: i32) -> (i32, i32, i32) {
    %c0_i32 = arith.constant 0 : i32
    %c0_i32_0 = arith.constant 0 : i32
    %c0_i32_1 = arith.constant 0 : i32
    return %arg0, %c0_i32, %c0_i32_0 : i32, i32, i32
  }
  func.func @transform_2(%arg0: i32) -> (i32, i32, i32) {
    %c0_i32 = arith.constant 0 : i32
    %c0_i32_0 = arith.constant 0 : i32
    %c0_i32_1 = arith.constant 0 : i32
    return %arg0, %c0_i32, %c0_i32_0 : i32, i32, i32
  }
}

</mosaic_0001>

<llo_original>
// kernel: tpu_custom_call.1
$region0: #{tpu_custom_call.1}
  #allocation0 [shape = 'u32[]', space=smem, size = 0x4, offset = 0x4, fixed_abs, tag = 'smem constant byte address 0x4 - core index']
  #allocation1 [shape = 'u32[144,128]{1,0:T(1,128)}', space=vmem, size = 0x12000, scoped, tag = 'internal scratch']
  %s0 = inlined_call_operand.hbm [shape: f32[8,2,32], index: 0, kind: input, shape index: {}]
  %s1 = inlined_call_operand.hbm [shape: f32[8,1,32], index: 1, kind: input, shape index: {}]
  %s2 = inlined_call_operand.hbm [shape: f32[8,2,32], index: 2, kind: output, shape index: {}]
  %s3 = sld [smem:[#allocation0]]
  $region26: #{tpu_custom_call.1} parent=0
    _
  %s5 = ssub.s32 1, %s3
  %s6 = scalar_select 0, %s5, %s3
  $region1: #{tpu_custom_call.1} parent=0
    #allocation2 [shape = 'u8[8192]{0}', space=vmem, size = 0x2000, scoped, tag = 'input window, operand 0, single buffered']
    #allocation3 [shape = 's32[1]{0}', space=sflag, size = 0x4, scoped, tag = 'scoped memory for tpu_custom_call.1']
    #allocation4 [shape = 's32[1]{0}', space=sflag, size = 0x4, scoped, tag = 'scoped memory for tpu_custom_call.1']
    #allocation5 [shape = 'u8[4096]{0}', space=vmem, size = 0x1000, scoped, tag = 'input window, operand 1, single buffered']
    #allocation6 [shape = 's32[1]{0}', space=sflag, size = 0x4, scoped, tag = 'scoped memory for tpu_custom_call.1']
    #allocation7 [shape = 'u8[8192]{0}', space=vmem, size = 0x2000, scoped, tag = 'output window, operand 0, single buffered']
    %7 = vsyncpa [#allocation3], 0
    %8 = vsyncpa [#allocation6], 0
    %9 = vsyncpa [#allocation4], 0
    // Predicated region
    $region2: #{tpu_custom_call.1} parent=1 // pred_check
      _
    $region3: #{tpu_custom_call.1} parent=1 // pred_check_branch
      %11 = sbr.rel (0) target = $region5
    $region4: #{tpu_custom_call.1} parent=1 // pred_region
      %s13 = ssub.s32 256, 256
      %14 = vsyncadd [#allocation3], %s13
      %s15 = sshll.u32 [#allocation2], 4
      %s16 = int_to_ptr.vmem [resolvable:$true] %s15
      %21 = dma.hbm_to_vmem [thread:$0]  %s0, 256, %s16, [#allocation3], 32, 32, 2
    $region5: #{tpu_custom_call.1} parent=1 // pred_fallthru
      _
    // Predicated region
    $region6: #{tpu_custom_call.1} parent=1 // pred_check
      _
    $region7: #{tpu_custom_call.1} parent=1 // pred_check_branch
      %23 = sbr.rel (0) target = $region9
    $region8: #{tpu_custom_call.1} parent=1 // pred_region
      %s25 = ssub.s32 128, 128
      %26 = vsyncadd [#allocation6], %s25
      %s27 = sshll.u32 [#allocation5], 4
      %s28 = int_to_ptr.vmem [resolvable:$true] %s27
      %33 = dma.hbm_to_vmem [thread:$0]  %s1, 128, %s28, [#allocation6], 16, 16, 1
    $region9: #{tpu_custom_call.1} parent=1 // pred_fallthru
      _
    // Predicated region
    $region10: #{tpu_custom_call.1} parent=1 // pred_check
      _
    $region11: #{tpu_custom_call.1} parent=1 // pred_check_branch
      %35 = sbr.rel (0) target = $region13
    $region12: #{tpu_custom_call.1} parent=1 // pred_region
      %36 = dma.done [#allocation3], 256
    $region13: #{tpu_custom_call.1} parent=1 // pred_fallthru
      _
    // Predicated region
    $region14: #{tpu_custom_call.1} parent=1 // pred_check
      _
    $region15: #{tpu_custom_call.1} parent=1 // pred_check_branch
      %38 = sbr.rel (0) target = $region17
    $region16: #{tpu_custom_call.1} parent=1 // pred_region
      %39 = dma.done [#allocation6], 128
    $region17: #{tpu_custom_call.1} parent=1 // pred_fallthru
      _
    %v40 = vld [vmem:[#allocation2] sm:$0x3]
    %v41 = vld [vmem:[#allocation2 + $0x2] sm:$0x3]
    %v42 = vld [vmem:[#allocation2 + $0x4] sm:$0x3]
    %v43 = vld [vmem:[#allocation2 + $0x6] sm:$0x3]
    %v44 = vld [vmem:[#allocation2 + $0x8] sm:$0x3]
    %v45 = vld [vmem:[#allocation2 + $0xa] sm:$0x3]
    %v46 = vld [vmem:[#allocation2 + $0xc] sm:$0x3]
    %v47 = vld [vmem:[#allocation2 + $0xe] sm:$0x3]
    %v48 = vld [vmem:[#allocation5] sm:$0x1]
    %v49 = vld [vmem:[#allocation5 + $0x1] sm:$0x1]
    %v50 = vld [vmem:[#allocation5 + $0x2] sm:$0x1]
    %v51 = vld [vmem:[#allocation5 + $0x3] sm:$0x1]
    %v52 = vld [vmem:[#allocation5 + $0x4] sm:$0x1]
    %v53 = vld [vmem:[#allocation5 + $0x5] sm:$0x1]
    %v54 = vld [vmem:[#allocation5 + $0x6] sm:$0x1]
    %v55 = vld [vmem:[#allocation5 + $0x7] sm:$0x1]
    %v64 = vlaneseq
    %v65 = vshrl.u32 %v64, 7
    %v66 = vsub.s32 0, %v65
    %v67 = vrot.slane %v48, %v66
    %v68 = vlaneseq
    %v69 = vshrl.u32 %v68, 7
    %v70 = vsub.s32 0, %v69
    %v71 = vrot.slane %v49, %v70
    %v72 = vlaneseq
    %v73 = vshrl.u32 %v72, 7
    %v74 = vsub.s32 0, %v73
    %v75 = vrot.slane %v50, %v74
    %v76 = vlaneseq
    %v77 = vshrl.u32 %v76, 7
    %v78 = vsub.s32 0, %v77
    %v79 = vrot.slane %v51, %v78
    %v80 = vlaneseq
    %v81 = vshrl.u32 %v80, 7
    %v82 = vsub.s32 0, %v81
    %v83 = vrot.slane %v52, %v82
    %v84 = vlaneseq
    %v85 = vshrl.u32 %v84, 7
    %v86 = vsub.s32 0, %v85
    %v87 = vrot.slane %v53, %v86
    %v88 = vlaneseq
    %v89 = vshrl.u32 %v88, 7
    %v90 = vsub.s32 0, %v89
    %v91 = vrot.slane %v54, %v90
    %v92 = vlaneseq
    %v93 = vshrl.u32 %v92, 7
    %v94 = vsub.s32 0, %v93
    %v95 = vrot.slane %v55, %v94
    %v104 = vadd.f32 %v40, %v67
    %v105 = vadd.f32 %v41, %v71
    %v106 = vadd.f32 %v42, %v75
    %v107 = vadd.f32 %v43, %v79
    %v108 = vadd.f32 %v44, %v83
    %v109 = vadd.f32 %v45, %v87
    %v110 = vadd.f32 %v46, %v91
    %v111 = vadd.f32 %v47, %v95
    %vm112 = vcmask 254976
    %113 = vst.msk [vmem:[#allocation7] sm:$0x3] %vm112, %v104
    %114 = vst.msk [vmem:[#allocation7 + $0x2] sm:$0x3] %vm112, %v105
    %115 = vst.msk [vmem:[#allocation7 + $0x4] sm:$0x3] %vm112, %v106
    %116 = vst.msk [vmem:[#allocation7 + $0x6] sm:$0x3] %vm112, %v107
    %117 = vst.msk [vmem:[#allocation7 + $0x8] sm:$0x3] %vm112, %v108
    %118 = vst.msk [vmem:[#allocation7 + $0xa] sm:$0x3] %vm112, %v109
    %119 = vst.msk [vmem:[#allocation7 + $0xc] sm:$0x3] %vm112, %v110
    %120 = vst.msk [vmem:[#allocation7 + $0xe] sm:$0x3] %vm112, %v111
    // Predicated region
    $region18: #{tpu_custom_call.1} parent=1 // pred_check
      _
    $region19: #{tpu_custom_call.1} parent=1 // pred_check_branch
      %122 = sbr.rel (0) target = $region21
    $region20: #{tpu_custom_call.1} parent=1 // pred_region
      %s124 = ssub.s32 256, 256
      %125 = vsyncadd [#allocation4], %s124
      %s126 = sshll.u32 [#allocation7], 4
      %s127 = int_to_ptr.vmem [resolvable:$true] %s126
      %132 = dma.vmem_to_hbm [thread:$0]  %s127, 256, %s2, [#allocation4], 32, 32, 2
    $region21: #{tpu_custom_call.1} parent=1 // pred_fallthru
      _
    // Predicated region
    $region22: #{tpu_custom_call.1} parent=1 // pred_check
      _
    $region23: #{tpu_custom_call.1} parent=1 // pred_check_branch
      %134 = sbr.rel (0) target = $region25
    $region24: #{tpu_custom_call.1} parent=1 // pred_region
      %135 = dma.done [#allocation4], 256
    $region25: #{tpu_custom_call.1} parent=1 // pred_fallthru
      _
    %136 = vsyncpa [#allocation3], 1
    %137 = vsyncpa [#allocation6], 1
    %138 = vsyncpa [#allocation4], 1

</llo_original>
